<compile_context>
chip_gen: v7x
topology: tpu7x:2x2x1
jax: 0.10.0
libtpu: 0.0.40
codegen_flags: <defaults>
</compile_context>

<pallas_src>
import jax
import jax.numpy as jnp
from jax.experimental import pallas as pl
from jax.experimental.pallas import tpu as pltpu


def _ce_loss_kernel(target_ref, pred_ref, out_ref):
    """One grid step: (tile_n, C) logits + (tile_n, 1) targets -> partial sum.

    Writes the block's summed per-row CE loss broadcast across a lane-dense
    (8, 128) output block (unmasked full-vreg store); the wrapper reads lane 0.
    """
    logits = pred_ref[...].astype(jnp.float32)            # (TN, C) f32
    tgt = target_ref[...]                                  # (TN, 1) int32
    c = logits.shape[-1]

    # Stable log-sum-exp, keeping the max-shifted logits around so the target
    # pick can reuse them (lse - picked == log(sum exp(shifted)) - shifted[tgt]).
    m = jnp.max(logits, axis=-1, keepdims=True)            # (TN, 1)
    shifted = logits - m                                    # (TN, C)
    sum_exp = jnp.sum(jnp.exp(shifted), axis=-1, keepdims=True)

    # Gather the shifted logit at the target class via one-hot select
    # (vectorized compare+select, no gather).
    col = jax.lax.broadcasted_iota(jnp.int32, shifted.shape, 1)
    picked_sh = jnp.sum(jnp.where(col == tgt, shifted, 0.0),
                        axis=-1, keepdims=True)             # (TN, 1)

    row_loss = jnp.log(sum_exp) - picked_sh                 # (TN, 1)

    # Mask padded rows (target == -1) and any out-of-range targets to 0.
    valid = jnp.logical_and(tgt >= 0, tgt < c)
    row_loss = jnp.where(valid, row_loss, 0.0)

    partial = jnp.sum(row_loss)                             # scalar f32
    out_ref[...] = jnp.full(out_ref.shape, partial, dtype=out_ref.dtype)


def _pick_tile_n(n, c, itemsize, target_block_bytes=2 * 1024 * 1024,
                 max_tile_n=4096):
    """Rows per block so one logits block is ~2 MiB, multiple of 8, <= padded N."""
    bytes_per_row = max(1, c * itemsize)
    rows = target_block_bytes // bytes_per_row
    rows = max(8, min(rows, max_tile_n))
    rows = (rows // 8) * 8
    n_pad8 = ((n + 7) // 8) * 8
    rows = min(rows, n_pad8)
    return max(8, (rows // 8) * 8)


def ce_loss(pred, target, *, tile_n=None):
    """Mean cross-entropy loss. pred: (N, C) float (f32 or bf16), target: (N,) int."""
    n, c = pred.shape
    itemsize = jnp.dtype(pred.dtype).itemsize
    if tile_n is None:
        tile_n = _pick_tile_n(n, c, itemsize)
    assert tile_n > 0 and tile_n % 8 == 0, "tile_n must be a positive multiple of 8"

    # Pad N up to a multiple of tile_n; padded rows get sentinel target -1
    # (masked out in-kernel), so ragged N is handled exactly.
    n_pad = ((n + tile_n - 1) // tile_n) * tile_n
    num_blocks = n_pad // tile_n

    target2d = target.astype(jnp.int32).reshape(n, 1)
    if n_pad != n:
        pred = jnp.pad(pred, ((0, n_pad - n), (0, 0)))
        target2d = jnp.pad(target2d, ((0, n_pad - n), (0, 0)), constant_values=-1)

    partials = pl.pallas_call(
        _ce_loss_kernel,
        out_shape=jax.ShapeDtypeStruct((8, num_blocks * 128), jnp.float32),
        grid_spec=pltpu.PrefetchScalarGridSpec(
            num_scalar_prefetch=0,
            grid=(num_blocks,),
            in_specs=[
                pl.BlockSpec((tile_n, 1), lambda i: (i, 0)),   # targets
                pl.BlockSpec((tile_n, c), lambda i: (i, 0)),   # logits
            ],
            # Each program owns its own lane-dense (8, 128) stripe -> no
            # cross-step accumulator, unmasked full-vreg stores.
            out_specs=pl.BlockSpec((8, 128), lambda i: (0, i)),
        ),
        compiler_params=pltpu.CompilerParams(
            dimension_semantics=("parallel",),
        ),
    )(target2d, pred)

    # Lane 0 / sublane 0 of each program's stripe holds that block's partial sum.
    block_sums = partials[0, ::128]                          # (num_blocks,)
    return jnp.sum(block_sums) / jnp.float32(n)


def _ce_loss_ref(pred, target):
    """Pure-JAX reference: nn.CrossEntropyLoss(reduction='none')(pred, target).mean()."""
    logp = jax.nn.log_softmax(pred.astype(jnp.float32), axis=-1)
    nll = -jnp.take_along_axis(logp, target.reshape(-1, 1).astype(jnp.int32), axis=-1)
    return nll.mean()


if __name__ == "__main__":
    key = jax.random.PRNGKey(0)
    k1, k2, k3, k4 = jax.random.split(key, 4)

    # Test 1: small f32, single block (auto tile selection).
    N, C = 8, 32
    pred = jax.random.normal(k1, (N, C), dtype=jnp.float32)
    target = jax.random.randint(k2, (N,), 0, C, dtype=jnp.int32)
    loss = ce_loss(pred, target)
    jax.block_until_ready(loss)
    ref = _ce_loss_ref(pred, target)
    assert jnp.allclose(loss, ref, atol=1e-5, rtol=1e-5), (loss, ref)

    # Test 2: ragged N + explicit small tile -> multi-block parallel grid + padded tail.
    N2, C2 = 37, 48
    pred2 = jax.random.normal(k3, (N2, C2), dtype=jnp.float32)
    target2 = jax.random.randint(k4, (N2,), 0, C2, dtype=jnp.int32)
    loss2 = ce_loss(pred2, target2, tile_n=8)
    jax.block_until_ready(loss2)
    ref2 = _ce_loss_ref(pred2, target2)
    assert jnp.allclose(loss2, ref2, atol=1e-5, rtol=1e-5), (loss2, ref2)

    # Test 3: bf16 logits in HBM (kernel upcasts to f32 for the LSE math).
    pred3 = pred2.astype(jnp.bfloat16)
    loss3 = ce_loss(pred3, target2, tile_n=16)
    jax.block_until_ready(loss3)
    ref3 = _ce_loss_ref(pred3.astype(jnp.float32), target2)
    assert jnp.allclose(loss3, ref3, atol=2e-2, rtol=2e-2), (loss3, ref3)

    print("KERNEL_OK")
</pallas_src>

<mosaic_0001>
module attributes {stable_mosaic.version = 11 : i64} {
  func.func @_ce_loss_kernel(%arg0: i32, %arg1: memref<8x1xi32, #tpu.memory_space<vmem>>, %arg2: memref<8x32xf32, #tpu.memory_space<vmem>>, %arg3: memref<8x128xf32, #tpu.memory_space<vmem>>) attributes {dimension_semantics = [#tpu.dimension_semantics<parallel>], iteration_bounds = array<i64: 1>, scalar_prefetch = 0 : i64, scratch_operands = 0 : i64, tpu.core_type = #tpu.core_type<tc>, window_params = [{transform_indices = @transform_0, window_bounds = array<i64: 8, 1>}, {transform_indices = @transform_1, window_bounds = array<i64: 8, 32>}, {transform_indices = @transform_2, window_bounds = array<i64: 8, 128>}]} {
    %c0 = arith.constant 0 : index
    %c0_0 = arith.constant 0 : index
    %0 = vector.load %arg2[%c0, %c0_0] : memref<8x32xf32, #tpu.memory_space<vmem>>, vector<8x32xf32>
    %c0_1 = arith.constant 0 : index
    %c0_2 = arith.constant 0 : index
    %1 = vector.load %arg1[%c0_1, %c0_2] : memref<8x1xi32, #tpu.memory_space<vmem>>, vector<8x1xi32>
    %cst = arith.constant dense<0xFF800000> : vector<8xf32>
    %2 = vector.multi_reduction <maximumf>, %0, %cst [1] : vector<8x32xf32> to vector<8xf32>
    %3 = vector.shape_cast %2 : vector<8xf32> to vector<8x1xf32>
    %4 = vector.broadcast %3 : vector<8x1xf32> to vector<8x32xf32>
    %5 = arith.subf %0, %4 : vector<8x32xf32>
    %6 = math.exp %5 : vector<8x32xf32>
    %cst_3 = arith.constant dense<0.000000e+00> : vector<8xf32>
    %7 = vector.multi_reduction <add>, %6, %cst_3 [1] : vector<8x32xf32> to vector<8xf32>
    %8 = vector.shape_cast %7 : vector<8xf32> to vector<8x1xf32>
    %9 = tpu.iota {dimensions = array<i32: 1>} : vector<8x32xi32>
    %10 = vector.broadcast %1 : vector<8x1xi32> to vector<8x32xi32>
    %11 = arith.cmpi eq, %9, %10 : vector<8x32xi32>
    %cst_4 = arith.constant 0.000000e+00 : f32
    %12 = vector.broadcast %cst_4 : f32 to vector<8x32xf32>
    %13 = arith.select %11, %5, %12 : vector<8x32xi1>, vector<8x32xf32>
    %cst_5 = arith.constant dense<0.000000e+00> : vector<8xf32>
    %14 = vector.multi_reduction <add>, %13, %cst_5 [1] : vector<8x32xf32> to vector<8xf32>
    %15 = vector.shape_cast %14 : vector<8xf32> to vector<8x1xf32>
    %16 = math.log %8 : vector<8x1xf32>
    %17 = arith.subf %16, %15 : vector<8x1xf32>
    %c0_i32 = arith.constant 0 : i32
    %18 = vector.broadcast %c0_i32 : i32 to vector<8x1xi32>
    %19 = arith.cmpi sge, %1, %18 : vector<8x1xi32>
    %c32_i32 = arith.constant 32 : i32
    %20 = vector.broadcast %c32_i32 : i32 to vector<8x1xi32>
    %21 = arith.cmpi slt, %1, %20 : vector<8x1xi32>
    %22 = arith.andi %19, %21 : vector<8x1xi1>
    %cst_6 = arith.constant 0.000000e+00 : f32
    %23 = vector.broadcast %cst_6 : f32 to vector<8x1xf32>
    %24 = arith.select %22, %17, %23 : vector<8x1xi1>, vector<8x1xf32>
    %25 = vector.shape_cast %24 : vector<8x1xf32> to vector<1x8x1xf32>
    %cst_7 = arith.constant dense<0.000000e+00> : vector<1xf32>
    %26 = vector.multi_reduction <add>, %25, %cst_7 [1, 2] : vector<1x8x1xf32> to vector<1xf32>
    %27 = vector.shape_cast %26 : vector<1xf32> to vector<1x1x1xf32>
    %28 = vector.extract %27[0, 0, 0] : f32 from vector<1x1x1xf32>
    %29 = vector.broadcast %28 : f32 to vector<8x128xf32>
    %c0_8 = arith.constant 0 : index
    %c0_9 = arith.constant 0 : index
    %30 = vector.load %arg3[%c0_8, %c0_9] : memref<8x128xf32, #tpu.memory_space<vmem>>, vector<8x128xf32>
    tpu.vector_store %arg3[%c0_8, %c0_9], %29 {strides = array<i32>} : memref<8x128xf32, #tpu.memory_space<vmem>>, vector<8x128xf32>,
    return
  }
  func.func @transform_0(%arg0: i32) -> (i32, i32) {
    %c0_i32 = arith.constant 0 : i32
    %c0_i32_0 = arith.constant 0 : i32
    return %arg0, %c0_i32 : i32, i32
  }
  func.func @transform_1(%arg0: i32) -> (i32, i32) {
    %c0_i32 = arith.constant 0 : i32
    %c0_i32_0 = arith.constant 0 : i32
    return %arg0, %c0_i32 : i32, i32
  }
  func.func @transform_2(%arg0: i32) -> (i32, i32) {
    %c0_i32 = arith.constant 0 : i32
    %c0_i32_0 = arith.constant 0 : i32
    return %c0_i32, %arg0 : i32, i32
  }
}

</mosaic_0001>

<llo_original>
// kernel: tpu_custom_call.1
$region0: #{tpu_custom_call.1}
  #allocation0 [shape = 'u32[]', space=smem, size = 0x4, offset = 0x4, fixed_abs, tag = 'smem constant byte address 0x4 - core index']
  #allocation1 [shape = 'u32[144,128]{1,0:T(1,128)}', space=vmem, size = 0x12000, scoped, tag = 'internal scratch']
  %s0 = inlined_call_operand.vmem [shape: s32[8,1], index: 0, kind: input, shape index: {}]
  %s1 = inlined_call_operand.vmem [shape: f32[8,32], index: 1, kind: input, shape index: {}]
  %s2 = inlined_call_operand.hbm [shape: f32[8,128], index: 2, kind: output, shape index: {}]
  %s3 = sld [smem:[#allocation0]]
  $region18: #{tpu_custom_call.1} parent=0
    _
  %s5 = ssub.s32 1, %s3
  %s6 = scalar_select 0, %s5, %s3
  $region1: #{tpu_custom_call.1} parent=0
    #allocation2 [shape = 'u8[4096]{0}', space=vmem, size = 0x1000, scoped, tag = 'output window, operand 0, single buffered']
    #allocation3 [shape = 's32[1]{0}', space=sflag, size = 0x4, scoped, tag = 'scoped memory for tpu_custom_call.1']
    %7 = vsyncpa [#allocation3], 0
    // Predicated region
    $region2: #{tpu_custom_call.1} parent=1 // pred_check
      _
    $region3: #{tpu_custom_call.1} parent=1 // pred_check_branch
      %9 = sbr.rel (0) target = $region5
    $region4: #{tpu_custom_call.1} parent=1 // pred_region
      _
    $region5: #{tpu_custom_call.1} parent=1 // pred_fallthru
      _
    // Predicated region
    $region6: #{tpu_custom_call.1} parent=1 // pred_check
      _
    $region7: #{tpu_custom_call.1} parent=1 // pred_check_branch
      %11 = sbr.rel (0) target = $region9
    $region8: #{tpu_custom_call.1} parent=1 // pred_region
      _
    $region9: #{tpu_custom_call.1} parent=1 // pred_fallthru
      _
    %v12 = vld [vmem:[%s1] sm:$0xff]
    %v13 = vld [vmem:[%s0] sm:$0xff]
    %vm14 = vcmask 261120
    %v15 = vsel %vm14, %v12, -inf
    %16 = vmax.xlane.f32.xlu0 %v15
    %v17 = vpop.xlane.xlu0 %16
    %v18 = vsub.f32 %v12, %v17
    %v19 = vmul.f32 %v18, 1.442695
    %v20 = vpow.pop %v19
    %v21 = vsel %vm14, %v20, 0.0
    %22 = vadd.xlane.f32.xlu0 %v21
    %v23 = vpop.xlane.xlu0 %22
    %v24 = vlaneseq
    %v25 = vand.u32 %v24, 127
    %26 = vset.pattern.permute.xlu0 0
    %27 = vperm.xlu0 %26, %v13
    %v28 = vpop.permute.xlu0 %27
    %vm29 = vcmp.eq.s32.totalorder %v25, %v28
    %v30 = vsel %vm29, %v18, 0.0
    %v31 = vsel %vm14, %v30, 0.0
    %32 = vadd.xlane.f32.xlu0 %v31
    %v33 = vpop.xlane.xlu0 %32
    %v34 = vlog2.pop %v23
    %v35 = vmul.f32 %v34, 0.6931472
    %v36 = vsub.f32 %v35, %v33
    %vm37 = vcmp.ge.s32.totalorder %v13, 0
    %vm38 = vcmp.lt.s32.totalorder %v13, 32
    %vm39 = vmand %vm37, %vm38
    %v40 = vsel %vm39, %v36, 0.0
    %vm41 = vcmask 7168
    %v42 = vsel %vm41, %v40, 0.0
    %43 = vadd.xlane.f32.xlu0 %v42
    %v44 = vpop.xlane.xlu0 %43
    %v45 = vrot.slane %v44, 4
    %v46 = vadd.f32 %v44, %v45
    %v47 = vrot.slane %v46, 2
    %v48 = vadd.f32 %v46, %v47
    %v49 = vrot.slane %v48, 1
    %v50 = vadd.f32 %v48, %v49
    %s51 = vtos %v50
    %v52 = vstv %s51
    %53 = vst [vmem:[#allocation2] sm:$0xff] %v52
    // Predicated region
    $region10: #{tpu_custom_call.1} parent=1 // pred_check
      _
    $region11: #{tpu_custom_call.1} parent=1 // pred_check_branch
      %55 = sbr.rel (0) target = $region13
    $region12: #{tpu_custom_call.1} parent=1 // pred_region
      %s57 = ssub.s32 128, 128
      %58 = vsyncadd [#allocation3], %s57
      %s60 = sshll.u32 [#allocation2], 4
      %s61 = int_to_ptr.vmem [resolvable:$true] %s60
      %63 = dma.vmem_to_hbm [thread:$0]  %s61, 128, %s2, [#allocation3]
    $region13: #{tpu_custom_call.1} parent=1 // pred_fallthru
      _
    // Predicated region
    $region14: #{tpu_custom_call.1} parent=1 // pred_check
      _
    $region15: #{tpu_custom_call.1} parent=1 // pred_check_branch
      %65 = sbr.rel (0) target = $region17
    $region16: #{tpu_custom_call.1} parent=1 // pred_region
      %66 = dma.done [#allocation3], 128
    $region17: #{tpu_custom_call.1} parent=1 // pred_fallthru
      _
    %67 = vsyncpa [#allocation3], 1

</llo_original>
